<compile_context>
chip_gen: v7x
topology: tpu7x:2x2x1
jax: 0.10.0
libtpu: 0.0.40
codegen_flags: <defaults>
</compile_context>

<pallas_src>
import functools

import jax
import jax.numpy as jnp
import numpy as np
from jax import lax
from jax.experimental import pallas as pl
from jax.experimental.pallas import tpu as pltpu

# ---- problem sizes (small, consistent with the module) ----------------------
N = 2          # batch
C_IN = 64      # dim   (must be divisible by the 32 GroupNorm groups)
C_OUT = 32     # dim_out
H = 16
W = 16
GROUPS = 32
EPS = 1e-5


# -----------------------------------------------------------------------------
# pltpu.roll shift-sign probe (run once, eagerly, outside jit).
# -----------------------------------------------------------------------------
def _roll_probe_kernel(x_ref, o_ref):
    o_ref[...] = pltpu.roll(x_ref[...], shift=1, axis=1)


_ROLL_MATCHES_JNP = None


def _roll_matches_jnp():
    """True iff pltpu.roll(x, s)[..., j] == x[..., (j - s) % n] (jnp.roll convention)."""
    global _ROLL_MATCHES_JNP
    if _ROLL_MATCHES_JNP is None:
        x = jnp.tile(jnp.arange(128, dtype=jnp.float32)[None, :], (8, 1))
        out = pl.pallas_call(
            _roll_probe_kernel,
            out_shape=jax.ShapeDtypeStruct((8, 128), jnp.float32),
        )(x)
        _ROLL_MATCHES_JNP = bool(out[0, 0] == 127.0)
    return _ROLL_MATCHES_JNP


# -----------------------------------------------------------------------------
# Fused kernel: GroupNorm(32) + SiLU + 3x3 conv (padding=1), one batch element
# per grid step, everything in channel-major / flattened-NCHW layout.
# -----------------------------------------------------------------------------
def _make_block_kernel(*, groups, cg, c_out, h, w, roll_jnp):
    hw = h * w
    n_lanes = cg * hw
    inv_cnt = 1.0 / float(n_lanes)

    def lane_shift(y, k):
        # z[..., j] = y[..., (j + k) % n_lanes]  (wrapped lanes are masked afterwards)
        kk = k % n_lanes
        if kk == 0:
            return y
        shift = (n_lanes - kk) if roll_jnp else kk
        return pltpu.roll(y, shift=shift, axis=1)

    def kernel(x_ref, w_ref, p_ref, o_ref):
        # x_ref: (1, G, CG*HW)       one batch element, one full group per row
        # w_ref: (9*CG*C_OUT, G)     conv weights, row = (tap*CG + e)*C_OUT + co
        # p_ref: (2*CG*G + C_OUT, 1) gamma parts | beta parts | conv bias (one DMA)
        # o_ref: (1, C_OUT, HW)      flattened-NCHW output block
        x = x_ref[0].astype(jnp.float32)                       # (G, CG*HW), 512 dense lanes

        # ---- GroupNorm(32): each row is exactly one group -> lane reductions only ----
        mean = jnp.sum(x, axis=1, keepdims=True) * inv_cnt     # (G, 1)
        xc = x - mean
        var = jnp.sum(xc * xc, axis=1, keepdims=True) * inv_cnt
        inv = lax.rsqrt(var + EPS)                             # (G, 1)

        # per-channel affine: channel = g*CG + (lane // HW)
        lane = lax.broadcasted_iota(jnp.int32, (1, n_lanes), 1)
        part_of_lane = lane // hw                              # (1, CG*HW), values in [0, CG)
        gamma_cols = [p_ref[e * groups:(e + 1) * groups, :] for e in range(cg)]
        beta_cols = [p_ref[(cg + e) * groups:(cg + e + 1) * groups, :]
                     for e in range(cg)]
        bias_col = p_ref[2 * cg * groups:2 * cg * groups + c_out, :]   # (C_OUT, 1)

        def per_channel(cols):                                 # (G,1) columns -> (G, CG*HW)
            v = cols[-1]
            for e in range(cg - 1):
                v = jnp.where(part_of_lane == e, cols[e], v)
            return v

        y = xc * (inv * per_channel(gamma_cols)) + per_channel(beta_cols)
        y = y * jax.nn.sigmoid(y)                              # SiLU
        # TODO(synk): dropout=0.0 in this configuration -> Identity; no dropout emitted.

        # ---- 3x3 conv (padding=1): lane-shift + border mask per tap, no im2col, ----
        # ---- no padded scratch; accumulate in registers.                        ----
        pout = lax.broadcasted_iota(jnp.int32, (1, hw), 1)     # output spatial index
        hh = pout // w
        ww = pout % w

        acc = jnp.zeros((c_out, hw), jnp.float32)
        for ky in range(3):
            for kx in range(3):
                dy, dx = ky - 1, kx - 1
                t = ky * 3 + kx
                ys = lane_shift(y, dy * w + dx)                # (G, CG*HW)
                d = None
                for e in range(cg):
                    row0 = (t * cg + e) * c_out
                    w_te = w_ref[row0:row0 + c_out, :]         # (C_OUT, G)
                    de = jnp.dot(w_te, ys[:, e * hw:(e + 1) * hw],
                                 preferred_element_type=jnp.float32,
                                 precision=lax.Precision.HIGHEST)
                    d = de if d is None else d + de
                if dy != 0 or dx != 0:                         # zero the padded-border taps
                    valid = ((hh >= -dy) & (hh < h - dy) &
                             (ww >= -dx) & (ww < w - dx))
                    d = jnp.where(valid, d, 0.0)
                acc = acc + d

        o_ref[0] = (acc + bias_col).astype(o_ref.dtype)        # fully lane-dense store

    return kernel


# -----------------------------------------------------------------------------
# Full Block forward: NCHW in -> NCHW out (matching the PyTorch module).
# -----------------------------------------------------------------------------
@functools.partial(jax.jit, static_argnames=("roll_jnp",))
def _block_forward_impl(x_nchw, gamma, beta, conv_w, conv_b, *, roll_jnp):
    n, c, h, w = x_nchw.shape
    c_out = conv_w.shape[0]
    groups = GROUPS
    cg = c // groups
    hw = h * w

    # (N, C, H, W) -> (N, G, CG*H*W): pure reshape of the contiguous NCHW input (no copy).
    xg = x_nchw.reshape(n, groups, cg * hw)

    # gamma/beta per (group, part) and conv bias packed into one column -> single DMA.
    params = jnp.concatenate(
        [gamma.reshape(groups, cg)[:, e] for e in range(cg)] +
        [beta.reshape(groups, cg)[:, e] for e in range(cg)] +
        [conv_b], axis=0).reshape(2 * cg * groups + c_out, 1)

    # conv weights (C_OUT, C_IN, 3, 3) -> rows [(tap*CG + e)*C_OUT + co], cols g.
    wt = jnp.transpose(conv_w, (2, 3, 1, 0)).reshape(9, groups, cg, c_out)
    w_pack = jnp.transpose(wt, (0, 2, 3, 1)).reshape(9 * cg * c_out, groups)

    kernel = _make_block_kernel(groups=groups, cg=cg, c_out=c_out, h=h, w=w,
                                roll_jnp=roll_jnp)

    out = pl.pallas_call(
        kernel,
        out_shape=jax.ShapeDtypeStruct((n, c_out, hw), x_nchw.dtype),
        grid=(n,),
        in_specs=[
            pl.BlockSpec((1, groups, cg * hw), lambda i: (i, 0, 0)),
            pl.BlockSpec((9 * cg * c_out, groups), lambda i: (0, 0)),
            pl.BlockSpec((2 * cg * groups + c_out, 1), lambda i: (0, 0)),
        ],
        out_specs=pl.BlockSpec((1, c_out, hw), lambda i: (i, 0, 0)),
        compiler_params=pltpu.CompilerParams(
            dimension_semantics=("parallel",)),   # v7x: one batch element per TensorCore
    )(xg, w_pack, params)

    return out.reshape(n, c_out, h, w)            # already NCHW -- no transpose needed


def block_forward(x_nchw, gamma, beta, conv_w, conv_b):
    return _block_forward_impl(x_nchw, gamma, beta, conv_w, conv_b,
                               roll_jnp=_roll_matches_jnp())


# ----------------------------- pure-JAX reference ----------------------------
def block_reference(x_nchw, gamma, beta, conv_w, conv_b):
    n, c, h, w = x_nchw.shape
    xg = x_nchw.reshape(n, GROUPS, c // GROUPS, h, w)
    mean = jnp.mean(xg, axis=(2, 3, 4), keepdims=True)
    var = jnp.mean((xg - mean) ** 2, axis=(2, 3, 4), keepdims=True)
    xn = ((xg - mean) / jnp.sqrt(var + EPS)).reshape(n, c, h, w)
    y = xn * gamma[None, :, None, None] + beta[None, :, None, None]
    y = y * jax.nn.sigmoid(y)
    out = lax.conv_general_dilated(
        y, conv_w, window_strides=(1, 1), padding=((1, 1), (1, 1)),
        dimension_numbers=("NCHW", "OIHW", "NCHW"))
    return out + conv_b[None, :, None, None]


if __name__ == "__main__":
    key = jax.random.PRNGKey(0)
    k_x, k_g, k_b, k_w, k_cb = jax.random.split(key, 5)

    x = jax.random.normal(k_x, (N, C_IN, H, W), jnp.float32)

    # deterministic synthetic parameters (shapes from the module's __init__)
    gamma = 1.0 + 0.1 * jax.random.normal(k_g, (C_IN,), jnp.float32)      # GroupNorm weight
    beta = 0.1 * jax.random.normal(k_b, (C_IN,), jnp.float32)             # GroupNorm bias
    conv_w = 0.05 * jax.random.normal(k_w, (C_OUT, C_IN, 3, 3), jnp.float32)
    conv_b = 0.05 * jax.random.normal(k_cb, (C_OUT,), jnp.float32)

    out = block_forward(x, gamma, beta, conv_w, conv_b)
    out = jax.block_until_ready(out)

    ref = block_reference(x, gamma, beta, conv_w, conv_b)
    np.testing.assert_allclose(np.asarray(out), np.asarray(ref), rtol=1e-4, atol=1e-4)

    print("KERNEL_OK")
</pallas_src>

<mosaic_0001>
module attributes {stable_mosaic.version = 11 : i64} {
  func.func @_roll_probe_kernel(%arg0: memref<8x128xf32, #tpu.memory_space<vmem>>, %arg1: memref<8x128xf32, #tpu.memory_space<vmem>>) attributes {dimension_semantics = [], scalar_prefetch = 0 : i64, scratch_operands = 0 : i64, tpu.core_type = #tpu.core_type<tc>} {
    %c0 = arith.constant 0 : index
    %c0_0 = arith.constant 0 : index
    %0 = vector.load %arg0[%c0, %c0_0] : memref<8x128xf32, #tpu.memory_space<vmem>>, vector<8x128xf32>
    %c1_i32 = arith.constant 1 : i32
    %1 = tpu.dynamic_rotate %0 by %c1_i32 dim 1 : vector<8x128xf32>, i32 -> vector<8x128xf32>
    %c0_1 = arith.constant 0 : index
    %c0_2 = arith.constant 0 : index
    %2 = vector.load %arg1[%c0_1, %c0_2] : memref<8x128xf32, #tpu.memory_space<vmem>>, vector<8x128xf32>
    tpu.vector_store %arg1[%c0_1, %c0_2], %1 {strides = array<i32>} : memref<8x128xf32, #tpu.memory_space<vmem>>, vector<8x128xf32>,
    return
  }
}

</mosaic_0001>

<llo_original>
// kernel: tpu_custom_call.1
$region0: #{tpu_custom_call.1}
  #allocation0 [shape = 'u32[]', space=smem, size = 0x4, offset = 0x4, fixed_abs, tag = 'smem constant byte address 0x4 - core index']
  #allocation1 [shape = 'u32[144,128]{1,0:T(1,128)}', space=vmem, size = 0x12000, scoped, tag = 'internal scratch']
  %s0 = inlined_call_operand.hbm [shape: f32[8,128], index: 0, kind: input, shape index: {}]
  %s1 = inlined_call_operand.hbm [shape: f32[8,128], index: 1, kind: output, shape index: {}]
  %s2 = sld [smem:[#allocation0]]
  $region18: #{tpu_custom_call.1} parent=0
    _
  %s4 = ssub.s32 1, %s2
  %s5 = scalar_select 0, %s4, %s2
  $region1: #{tpu_custom_call.1} parent=0
    #allocation2 [shape = 'u8[4096]{0}', space=vmem, size = 0x1000, scoped, tag = 'input window, operand 0, single buffered']
    #allocation3 [shape = 's32[1]{0}', space=sflag, size = 0x4, scoped, tag = 'scoped memory for tpu_custom_call.1']
    #allocation4 [shape = 's32[1]{0}', space=sflag, size = 0x4, scoped, tag = 'scoped memory for tpu_custom_call.1']
    #allocation5 [shape = 'u8[4096]{0}', space=vmem, size = 0x1000, scoped, tag = 'output window, operand 0, single buffered']
    %6 = vsyncpa [#allocation3], 0
    %7 = vsyncpa [#allocation4], 0
    // Predicated region
    $region2: #{tpu_custom_call.1} parent=1 // pred_check
      _
    $region3: #{tpu_custom_call.1} parent=1 // pred_check_branch
      %9 = sbr.rel (0) target = $region5
    $region4: #{tpu_custom_call.1} parent=1 // pred_region
      %s11 = ssub.s32 128, 128
      %12 = vsyncadd [#allocation3], %s11
      %s14 = sshll.u32 [#allocation2], 4
      %s15 = int_to_ptr.vmem [resolvable:$true] %s14
      %17 = dma.hbm_to_vmem [thread:$0]  %s0, 128, %s15, [#allocation3]
    $region5: #{tpu_custom_call.1} parent=1 // pred_fallthru
      _
    // Predicated region
    $region6: #{tpu_custom_call.1} parent=1 // pred_check
      _
    $region7: #{tpu_custom_call.1} parent=1 // pred_check_branch
      %19 = sbr.rel (0) target = $region9
    $region8: #{tpu_custom_call.1} parent=1 // pred_region
      %20 = dma.done [#allocation3], 128
    $region9: #{tpu_custom_call.1} parent=1 // pred_fallthru
      _
    %v21 = vld [vmem:[#allocation2] sm:$0xff]
    %22 = vrot.lane.b32.xlu0 %v21, 1
    %v23 = vpop.permute.xlu0 %22
    %24 = vst [vmem:[#allocation5] sm:$0xff] %v23
    // Predicated region
    $region10: #{tpu_custom_call.1} parent=1 // pred_check
      _
    $region11: #{tpu_custom_call.1} parent=1 // pred_check_branch
      %26 = sbr.rel (0) target = $region13
    $region12: #{tpu_custom_call.1} parent=1 // pred_region
      %s28 = ssub.s32 128, 128
      %29 = vsyncadd [#allocation4], %s28
      %s31 = sshll.u32 [#allocation5], 4
      %s32 = int_to_ptr.vmem [resolvable:$true] %s31
      %34 = dma.vmem_to_hbm [thread:$0]  %s32, 128, %s1, [#allocation4]
    $region13: #{tpu_custom_call.1} parent=1 // pred_fallthru
      _
    // Predicated region
    $region14: #{tpu_custom_call.1} parent=1 // pred_check
      _
    $region15: #{tpu_custom_call.1} parent=1 // pred_check_branch
      %36 = sbr.rel (0) target = $region17
    $region16: #{tpu_custom_call.1} parent=1 // pred_region
      %37 = dma.done [#allocation4], 128
    $region17: #{tpu_custom_call.1} parent=1 // pred_fallthru
      _
    %38 = vsyncpa [#allocation3], 1
    %39 = vsyncpa [#allocation4], 1

</llo_original>
